<compile_context>
chip_gen: v7x
topology: tpu7x:2x2x1
jax: 0.10.0
libtpu: 0.0.40
codegen_flags: <defaults>
</compile_context>

<pallas_src>
import functools

import jax
import jax.numpy as jnp
from jax import lax
from jax.experimental import pallas as pl
from jax.experimental.pallas import tpu as pltpu


def _rmsnorm_kernel(x_ref, w_ref, o_ref, *, eps, true_dim):
    # x_ref: (tile_rows, dim_pad), w_ref: (1, dim_pad) already in output dtype,
    # o_ref: (tile_rows, dim_pad).  Padded lanes of x/w are zero, so they do
    # not perturb the sum of squares and produce zero outputs (sliced off in
    # the wrapper).
    x = x_ref[...].astype(jnp.float32)                        # x.float()
    # mean over the *true* hidden dim (padded lanes contribute zero).
    ms = jnp.sum(x * x, axis=-1, keepdims=True) * (1.0 / true_dim)
    normed = (x * lax.rsqrt(ms + eps)).astype(o_ref.dtype)    # .type_as(x)
    o_ref[...] = normed * w_ref[...]                          # * weight


def _row_alignment(dtype) -> int:
    # Sublane packing: 8 rows for 4-byte dtypes, 16 for 2-byte, 32 for 1-byte.
    itemsize = jnp.dtype(dtype).itemsize
    return max(8, 32 // itemsize)


def _vmem_capacity_bytes() -> int:
    try:
        return int(pltpu.get_tpu_info().vmem_capacity_bytes)
    except Exception:
        return 64 << 20  # conservative fallback (v7x-sized VMEM)


def rmsnorm(x, weight, eps):
    """x: (..., dim) array, weight: (dim,) array."""
    orig_shape = x.shape
    dim = orig_shape[-1]
    rows = 1
    for s in orig_shape[:-1]:
        rows *= s

    x2d = x.reshape(rows, dim)
    # Pre-cast weight once in the wrapper; avoids a per-grid-step VPU cast.
    w2d = weight.astype(x.dtype).reshape(1, dim)

    # --- lane padding: keep the output last dim a multiple of 128 so stores
    # are unmasked / lane-dense.
    dim_pad = ((dim + 127) // 128) * 128
    if dim_pad != dim:
        x2d = jnp.pad(x2d, ((0, 0), (0, dim_pad - dim)))
        w2d = jnp.pad(w2d, ((0, 0), (0, dim_pad - dim)))

    itemsize = jnp.dtype(x.dtype).itemsize
    align = _row_alignment(x.dtype)

    # --- row tile selection: biggest tile (<= 1024 rows, multiple of the
    # sublane alignment) whose double-buffered in+out tiles fit in ~half of
    # this chip's VMEM.  v7x (64 MiB) thus gets roughly half the v6e tile.
    vmem_capacity = _vmem_capacity_bytes()
    vmem_budget = vmem_capacity // 2
    bytes_per_row = 2 * 2 * dim_pad * itemsize  # 2 buffers x (in tile + out tile)
    tile_rows = max(align, min(1024, vmem_budget // max(bytes_per_row, 1)))
    tile_rows = max(align, (tile_rows // align) * align)
    # Never tile past the (alignment-rounded) number of rows we actually have.
    tile_rows = min(tile_rows, ((rows + align - 1) // align) * align)

    # --- row padding instead of a hard divisibility assert.
    grid_rows = pl.cdiv(rows, tile_rows)
    padded_rows = grid_rows * tile_rows
    if padded_rows != rows:
        # Zero rows are safe: mean(x^2)=0 -> rsqrt(eps) finite -> output 0.
        x2d = jnp.pad(x2d, ((0, padded_rows - rows), (0, 0)))

    # --- raise the scoped VMEM limit to cover the pipeline buffers (+margin),
    # staying comfortably under the physical capacity.
    need = 2 * 2 * tile_rows * dim_pad * itemsize + dim_pad * itemsize
    vmem_limit = int(min(vmem_capacity * 9 // 10,
                         max(need + (4 << 20), 32 << 20)))

    out = pl.pallas_call(
        functools.partial(_rmsnorm_kernel, eps=eps, true_dim=dim),
        out_shape=jax.ShapeDtypeStruct((padded_rows, dim_pad), x.dtype),
        grid_spec=pltpu.PrefetchScalarGridSpec(
            num_scalar_prefetch=0,
            grid=(grid_rows,),
            in_specs=[
                pl.BlockSpec((tile_rows, dim_pad), lambda i: (i, 0)),  # x tile
                pl.BlockSpec((1, dim_pad), lambda i: (0, 0)),          # weight (resident)
            ],
            out_specs=pl.BlockSpec((tile_rows, dim_pad), lambda i: (i, 0)),
        ),
        compiler_params=pltpu.CompilerParams(
            # "parallel" is load-bearing on v7x (2 TCs share the row grid);
            # a no-op on v5e/v6e.
            dimension_semantics=("parallel",),
            vmem_limit_bytes=vmem_limit,
        ),
    )(x2d, w2d)

    if padded_rows != rows:
        out = out[:rows]
    if dim_pad != dim:
        out = out[:, :dim]
    return out.reshape(orig_shape)


def _reference(x, weight, eps):
    # Same semantics as the PyTorch module (and the kernel): normalize in f32,
    # cast back to x.dtype, multiply by weight in x.dtype.
    xf = x.astype(jnp.float32)
    normed = (xf * lax.rsqrt(jnp.mean(xf * xf, axis=-1, keepdims=True) + eps)
              ).astype(x.dtype)
    return normed * weight.astype(x.dtype)


if __name__ == "__main__":
    root = jax.random.PRNGKey(0)
    k1, k2, k3, kw = jax.random.split(root, 4)
    eps = 1e-5

    # Case 1: f32, rows NOT a multiple of the tile (exercises row padding),
    # dim a multiple of 128 (lane-dense stores).
    b1, s1, d1 = 2, 5, 128
    x1 = jax.random.normal(k1, (b1, s1, d1), dtype=jnp.float32)
    w1 = jnp.ones((d1,), dtype=jnp.float32)
    o1 = jax.block_until_ready(rmsnorm(x1, w1, eps))
    assert o1.shape == x1.shape
    assert jnp.allclose(o1, _reference(x1, w1, eps), atol=1e-5, rtol=1e-5), \
        "case1 mismatch vs reference"

    # Case 2: small non-128 hidden dim (exercises lane padding) with a
    # non-trivial weight.
    b2, s2, d2 = 2, 8, 32
    x2 = jax.random.normal(k2, (b2, s2, d2), dtype=jnp.float32)
    w2 = 0.5 + jax.random.uniform(kw, (d2,), dtype=jnp.float32)
    o2 = jax.block_until_ready(rmsnorm(x2, w2, eps))
    assert o2.shape == x2.shape
    assert jnp.allclose(o2, _reference(x2, w2, eps), atol=1e-5, rtol=1e-5), \
        "case2 mismatch vs reference"

    # Case 3: bf16 activations (exercises the 16-row sublane alignment path;
    # reduction still done in f32).
    b3, s3, d3 = 2, 8, 128
    x3 = jax.random.normal(k3, (b3, s3, d3), dtype=jnp.bfloat16)
    w3 = jnp.ones((d3,), dtype=jnp.float32)
    o3 = jax.block_until_ready(rmsnorm(x3, w3, eps))
    assert o3.shape == x3.shape and o3.dtype == jnp.bfloat16
    assert jnp.allclose(o3.astype(jnp.float32),
                        _reference(x3, w3, eps).astype(jnp.float32),
                        atol=1e-2, rtol=1e-2), "case3 mismatch vs reference"

    print("KERNEL_OK")
</pallas_src>

<mosaic_0001>
module attributes {stable_mosaic.version = 11 : i64} {
  func.func @_rmsnorm_kernel(%arg0: i32, %arg1: memref<16x128xf32, #tpu.memory_space<vmem>>, %arg2: memref<1x128xf32, #tpu.memory_space<vmem>>, %arg3: memref<16x128xf32, #tpu.memory_space<vmem>>) attributes {dimension_semantics = [#tpu.dimension_semantics<parallel>], iteration_bounds = array<i64: 1>, scalar_prefetch = 0 : i64, scratch_operands = 0 : i64, tpu.core_type = #tpu.core_type<tc>, window_params = [{transform_indices = @transform_0, window_bounds = array<i64: 16, 128>}, {pipeline_mode = #tpu.pipeline_mode<synchronous>, transform_indices = @transform_1, window_bounds = array<i64: 1, 128>}, {transform_indices = @transform_2, window_bounds = array<i64: 16, 128>}]} {
    %c0 = arith.constant 0 : index
    %c0_0 = arith.constant 0 : index
    %0 = vector.load %arg1[%c0, %c0_0] : memref<16x128xf32, #tpu.memory_space<vmem>>, vector<16x128xf32>
    %1 = arith.mulf %0, %0 : vector<16x128xf32>
    %cst = arith.constant dense<0.000000e+00> : vector<16xf32>
    %2 = vector.multi_reduction <add>, %1, %cst [1] : vector<16x128xf32> to vector<16xf32>
    %3 = vector.shape_cast %2 : vector<16xf32> to vector<16x1xf32>
    %cst_1 = arith.constant 7.812500e-03 : f32
    %4 = vector.broadcast %cst_1 : f32 to vector<16x1xf32>
    %5 = arith.mulf %3, %4 : vector<16x1xf32>
    %cst_2 = arith.constant 9.99999974E-6 : f32
    %6 = vector.broadcast %cst_2 : f32 to vector<16x1xf32>
    %7 = arith.addf %5, %6 : vector<16x1xf32>
    %8 = math.rsqrt %7 : vector<16x1xf32>
    %9 = vector.broadcast %8 : vector<16x1xf32> to vector<16x128xf32>
    %10 = arith.mulf %0, %9 : vector<16x128xf32>
    %c0_3 = arith.constant 0 : index
    %c0_4 = arith.constant 0 : index
    %11 = vector.load %arg2[%c0_3, %c0_4] : memref<1x128xf32, #tpu.memory_space<vmem>>, vector<1x128xf32>
    %12 = vector.broadcast %11 : vector<1x128xf32> to vector<16x128xf32>
    %13 = arith.mulf %10, %12 : vector<16x128xf32>
    %c0_5 = arith.constant 0 : index
    %c0_6 = arith.constant 0 : index
    %14 = vector.load %arg3[%c0_5, %c0_6] : memref<16x128xf32, #tpu.memory_space<vmem>>, vector<16x128xf32>
    tpu.vector_store %arg3[%c0_5, %c0_6], %13 {strides = array<i32>} : memref<16x128xf32, #tpu.memory_space<vmem>>, vector<16x128xf32>,
    return
  }
  func.func @transform_0(%arg0: i32) -> (i32, i32) {
    %c0_i32 = arith.constant 0 : i32
    %c0_i32_0 = arith.constant 0 : i32
    return %arg0, %c0_i32 : i32, i32
  }
  func.func @transform_1(%arg0: i32) -> (i32, i32) {
    %c0_i32 = arith.constant 0 : i32
    %c0_i32_0 = arith.constant 0 : i32
    %c0_i32_1 = arith.constant 0 : i32
    return %c0_i32, %c0_i32_0 : i32, i32
  }
  func.func @transform_2(%arg0: i32) -> (i32, i32) {
    %c0_i32 = arith.constant 0 : i32
    %c0_i32_0 = arith.constant 0 : i32
    return %arg0, %c0_i32 : i32, i32
  }
}

</mosaic_0001>

<llo_original>
// kernel: tpu_custom_call.1
$region0: #{tpu_custom_call.1}
  #allocation0 [shape = 'u32[]', space=smem, size = 0x4, offset = 0x4, fixed_abs, tag = 'smem constant byte address 0x4 - core index']
  #allocation1 [shape = 'u32[144,128]{1,0:T(1,128)}', space=vmem, size = 0x12000, scoped, tag = 'internal scratch']
  %s0 = inlined_call_operand.hbm [shape: f32[16,128], index: 0, kind: input, shape index: {}]
  %s1 = inlined_call_operand.vmem [shape: f32[1,128], index: 1, kind: input, shape index: {}]
  %s2 = inlined_call_operand.hbm [shape: f32[16,128], index: 2, kind: output, shape index: {}]
  %s3 = sld [smem:[#allocation0]]
  $region22: #{tpu_custom_call.1} parent=0
    _
  %s5 = ssub.s32 1, %s3
  %s6 = scalar_select 0, %s5, %s3
  $region1: #{tpu_custom_call.1} parent=0
    #allocation2 [shape = 'u8[8192]{0}', space=vmem, size = 0x2000, scoped, tag = 'input window, operand 0, single buffered']
    #allocation3 [shape = 's32[1]{0}', space=sflag, size = 0x4, scoped, tag = 'scoped memory for tpu_custom_call.1']
    #allocation4 [shape = 's32[1]{0}', space=sflag, size = 0x4, scoped, tag = 'scoped memory for tpu_custom_call.1']
    #allocation5 [shape = 'u8[8192]{0}', space=vmem, size = 0x2000, scoped, tag = 'output window, operand 0, single buffered']
    %7 = vsyncpa [#allocation3], 0
    %8 = vsyncpa [#allocation4], 0
    // Predicated region
    $region2: #{tpu_custom_call.1} parent=1 // pred_check
      _
    $region3: #{tpu_custom_call.1} parent=1 // pred_check_branch
      %10 = sbr.rel (0) target = $region5
    $region4: #{tpu_custom_call.1} parent=1 // pred_region
      %s12 = ssub.s32 256, 256
      %13 = vsyncadd [#allocation3], %s12
      %s14 = sshll.u32 [#allocation2], 4
      %s15 = int_to_ptr.vmem [resolvable:$true] %s14
      %20 = dma.hbm_to_vmem [thread:$0]  %s0, 256, %s15, [#allocation3], 128, 128, 8
    $region5: #{tpu_custom_call.1} parent=1 // pred_fallthru
      _
    // Predicated region
    $region6: #{tpu_custom_call.1} parent=1 // pred_check
      _
    $region7: #{tpu_custom_call.1} parent=1 // pred_check_branch
      %22 = sbr.rel (0) target = $region9
    $region8: #{tpu_custom_call.1} parent=1 // pred_region
      _
    $region9: #{tpu_custom_call.1} parent=1 // pred_fallthru
      _
    // Predicated region
    $region10: #{tpu_custom_call.1} parent=1 // pred_check
      _
    $region11: #{tpu_custom_call.1} parent=1 // pred_check_branch
      %24 = sbr.rel (0) target = $region13
    $region12: #{tpu_custom_call.1} parent=1 // pred_region
      %25 = dma.done [#allocation3], 256
    $region13: #{tpu_custom_call.1} parent=1 // pred_fallthru
      _
    %v26 = vld [vmem:[#allocation2] sm:$0xff]
    %v27 = vld [vmem:[#allocation2 + $0x8] sm:$0xff]
    %v28 = vmul.f32 %v26, %v26
    %v29 = vmul.f32 %v27, %v27
    %30 = vadd.xlane.f32.xlu0 %v28
    %v31 = vpop.xlane.xlu0 %30
    %32 = vadd.xlane.f32.xlu0 %v29
    %v33 = vpop.xlane.xlu0 %32
    %v34 = vmul.f32 %v31, 0.0078125
    %v35 = vmul.f32 %v33, 0.0078125
    %v36 = vadd.f32 %v34, 1e-05
    %v37 = vadd.f32 %v35, 1e-05
    %v38 = vrsqrt.pop %v36
    %v39 = vrsqrt.pop %v37
    %v40 = vmul.f32 %v26, %v38
    %v41 = vmul.f32 %v27, %v39
    %v42 = vld [vmem:[%s1] sm:$0x1]
    %v44 = vlaneseq
    %v45 = vshrl.u32 %v44, 7
    %v46 = vsub.s32 0, %v45
    %v47 = vrot.slane %v42, %v46
    %v49 = vmul.f32 %v40, %v47
    %v50 = vmul.f32 %v41, %v47
    %51 = vst [vmem:[#allocation5] sm:$0xff] %v49
    %52 = vst [vmem:[#allocation5 + $0x8] sm:$0xff] %v50
    // Predicated region
    $region14: #{tpu_custom_call.1} parent=1 // pred_check
      _
    $region15: #{tpu_custom_call.1} parent=1 // pred_check_branch
      %54 = sbr.rel (0) target = $region17
    $region16: #{tpu_custom_call.1} parent=1 // pred_region
      %s56 = ssub.s32 256, 256
      %57 = vsyncadd [#allocation4], %s56
      %s58 = sshll.u32 [#allocation5], 4
      %s59 = int_to_ptr.vmem [resolvable:$true] %s58
      %64 = dma.vmem_to_hbm [thread:$0]  %s59, 256, %s2, [#allocation4], 128, 128, 8
    $region17: #{tpu_custom_call.1} parent=1 // pred_fallthru
      _
    // Predicated region
    $region18: #{tpu_custom_call.1} parent=1 // pred_check
      _
    $region19: #{tpu_custom_call.1} parent=1 // pred_check_branch
      %66 = sbr.rel (0) target = $region21
    $region20: #{tpu_custom_call.1} parent=1 // pred_region
      %67 = dma.done [#allocation4], 256
    $region21: #{tpu_custom_call.1} parent=1 // pred_fallthru
      _
    %68 = vsyncpa [#allocation3], 1
    %69 = vsyncpa [#allocation4], 1

</llo_original>
